<compile_context>
chip_gen: v7x
topology: tpu7x:2x2x1
jax: 0.10.0
libtpu: 0.0.40
codegen_flags: <defaults>
</compile_context>

<pallas_src>
import math

import jax
import jax.numpy as jnp
from jax.experimental import pallas as pl
from jax.experimental.pallas import tpu as pltpu


# ---------------------------------------------------------------------------
# Generation-aware constants (safe fallbacks if the query is unavailable).
# ---------------------------------------------------------------------------
def _physical_vmem_bytes() -> int:
    try:
        info = pltpu.get_tpu_info()
        return int(getattr(info, "vmem_capacity_bytes", 128 << 20))
    except Exception:
        return 128 << 20


def _scoped_vmem_budget() -> int:
    # Use at most half of physical VMEM for this kernel's pipeline buffers:
    # 32 MiB on v5e/v6e (128 MiB physical) and 32 MiB on v7x (64 MiB physical).
    return min(32 << 20, _physical_vmem_bytes() // 2)


def _default_min_pallas_bytes() -> int:
    # v7x (64 MiB-VMEM tell, 3.2 TB/s HBM): fixed custom-call + grid-step costs
    # dominate up to ~1 MiB, so fall back to the fused XLA add earlier there.
    if _physical_vmem_bytes() <= (64 << 20):
        return 1 << 20
    return 256 << 10


def _min_grid_steps() -> int:
    # v7x has 2 TensorCores per chip: keep >= 2x cores grid steps so the
    # "parallel" axis splits evenly across the megacore.  v5e/v6e: single TC.
    if _physical_vmem_bytes() <= (64 << 20):
        return 4
    return 1


# ---------------------------------------------------------------------------
# Buffer construction (mirrors nn.Module.__init__) -- plain JAX, done once.
# ---------------------------------------------------------------------------
def build_positional_encoding(d_model: int, max_seq_length: int,
                              dtype=jnp.float32) -> jnp.ndarray:
    """Returns the pe buffer of shape (1, max_seq_length, d_model)."""
    assert d_model % 2 == 0, "d_model must be even (as in the PyTorch module)"
    position = jnp.arange(0, max_seq_length, dtype=jnp.float32)[:, None]      # (S, 1)
    div_term = jnp.exp(
        jnp.arange(0, d_model, 2, dtype=jnp.float32) * -(math.log(10000.0) / d_model)
    )                                                                          # (D/2,)
    angles = position * div_term                                               # (S, D/2)
    pe = jnp.zeros((max_seq_length, d_model), dtype=jnp.float32)
    pe = pe.at[:, 0::2].set(jnp.sin(angles))
    pe = pe.at[:, 1::2].set(jnp.cos(angles))
    return pe[None, :, :].astype(dtype)                                        # (1, S, D)


# ---------------------------------------------------------------------------
# Kernel body: broadcast the shared pe tile over the batch dim and add.
# ---------------------------------------------------------------------------
def _add_pe_kernel(x_ref, pe_ref, o_ref):
    # x_ref:  (B, tr, 128) tile of x (x.dtype)
    # pe_ref: (1, tr, 128) shared positional-encoding tile
    # o_ref:  (B, tr, 128) output tile (result_type(x, pe))
    o_ref[...] = (x_ref[...] + pe_ref[...]).astype(o_ref.dtype)


# ---------------------------------------------------------------------------
# Lane-dense path: view (B, S, D) as (B, S*D/128, 128), grid over row tiles.
# ---------------------------------------------------------------------------
def _forward_lane_dense(x, pe_rows, out_dtype, row_tile):
    B, S, D = x.shape
    rows = (S * D) // 128
    x3 = x.reshape(B, rows, 128)           # contiguous row-major reshape: free

    budget = _scoped_vmem_budget()
    x_item = jnp.dtype(x.dtype).itemsize
    pe_item = jnp.dtype(pe_rows.dtype).itemsize
    out_item = jnp.dtype(out_dtype).itemsize

    # Accurate accounting: double-buffered bytes per tile row over all operands.
    per_row = 2 * 128 * (B * x_item + pe_item + B * out_item)
    headroom = 2 << 20
    tr = min(rows, row_tile, max(8, (budget - headroom) // per_row))

    # Megacore (v7x): cap the tile so the grid has >= ~2x cores steps, but
    # never shrink below the ~1 MiB/tile roofline sweet spot.
    min_steps = _min_grid_steps()
    if min_steps > 1 and rows > tr:
        steps_cap = (rows // min_steps // 8) * 8
        if steps_cap * 128 * B * x_item >= (1 << 20):
            tr = min(tr, steps_cap)

    if tr >= rows:
        tr = rows                           # full extent satisfies the tiling rule
    else:
        tr = max(8, (tr // 8) * 8)          # multiple of 8 sublanes
    n_rt = pl.cdiv(rows, tr)

    # (8,128) rule: when tr is not a multiple of 8 (only possible when
    # tr == rows), every array's row extent must equal tr -- slice pe prefix.
    if tr % 8 != 0 and pe_rows.shape[1] != tr:
        pe_rows = pe_rows[:, :rows, :]

    tile_bytes = 2 * tr * 128 * (B * x_item + pe_item + B * out_item)
    vmem_limit = int(min(budget, max(16 << 20, tile_bytes + headroom)))

    out = pl.pallas_call(
        _add_pe_kernel,
        out_shape=jax.ShapeDtypeStruct((B, rows, 128), out_dtype),
        grid_spec=pltpu.PrefetchScalarGridSpec(
            num_scalar_prefetch=0,
            grid=(n_rt,),                   # 1-D grid: pe read once per row tile
            in_specs=[
                pl.BlockSpec((B, tr, 128), lambda rt: (0, rt, 0)),
                pl.BlockSpec((1, tr, 128), lambda rt: (0, rt, 0)),
            ],
            out_specs=pl.BlockSpec((B, tr, 128), lambda rt: (0, rt, 0)),
        ),
        compiler_params=pltpu.CompilerParams(
            dimension_semantics=("parallel",),
            vmem_limit_bytes=vmem_limit,
        ),
    )(x3, pe_rows)
    return out.reshape(B, S, D)


# ---------------------------------------------------------------------------
# Forward wrapper (mirrors nn.Module.forward).
# ---------------------------------------------------------------------------
def positional_encoding_forward(
    x: jnp.ndarray,
    pe: jnp.ndarray,
    *,
    row_tile: int = 4096,
    force_pallas: bool = False,
    min_pallas_bytes: int | None = None,
) -> jnp.ndarray:
    """x: (B, S, D), pe: (1, max_seq, D) buffer. Returns x + pe[:, :S]."""
    B, S, D = x.shape
    assert pe.ndim == 3 and pe.shape[0] == 1 and pe.shape[2] == D
    max_seq = pe.shape[1]
    if S > max_seq:
        raise ValueError(f"sequence length {S} exceeds max_seq_length {max_seq}")
    out_dtype = jnp.result_type(x.dtype, pe.dtype)

    if min_pallas_bytes is None:
        min_pallas_bytes = _default_min_pallas_bytes()

    total_bytes = x.size * jnp.dtype(x.dtype).itemsize
    too_small = (not force_pallas) and total_bytes < min_pallas_bytes

    # Ragged shapes (S*D not a multiple of 128) would force masked partial
    # stores in Pallas; the fused XLA add is already near-roofline for an
    # elementwise op, so it is used instead.
    if too_small or (S * D) % 128 != 0:
        return (x + pe[:, :S, :]).astype(out_dtype)

    # Lane-dense path.  Reshaping the *full* pe buffer is a free metadata op
    # (no wrapper-side slice copy); the grid only visits the first
    # ceil(rows/tr) tiles, so only the needed prefix is ever DMA'd.
    if (max_seq * D) % 128 == 0:
        pe_rows = pe.reshape(1, (max_seq * D) // 128, 128)
    else:
        pe_rows = pe[:, :S, :].reshape(1, (S * D) // 128, 128)
    return _forward_lane_dense(x, pe_rows, out_dtype, row_tile)


class PositionalEncoding:
    """JAX/Pallas counterpart of the PyTorch module."""

    def __init__(self, d_model: int, max_seq_length: int, pe_dtype=jnp.float32):
        # pe_dtype=jnp.bfloat16 (opt-in) cuts pe/out HBM traffic for bf16
        # activations but diverges from strict fp32-buffer promotion semantics.
        self.d_model = d_model
        self.max_seq_length = max_seq_length
        self.pe = build_positional_encoding(d_model, max_seq_length, dtype=pe_dtype)

    def __call__(self, x, **kwargs):
        return positional_encoding_forward(x, self.pe, **kwargs)


# ---------------------------------------------------------------------------
# Demo / self-check
# ---------------------------------------------------------------------------
if __name__ == "__main__":
    key = jax.random.PRNGKey(0)

    # 1) Small shapes consistent with the module: batch=2, seq=8, d_model=32.
    #    (force_pallas=True so the Pallas path runs despite the tiny size.)
    batch, seq, d_model = 2, 8, 32
    mod = PositionalEncoding(d_model, max_seq_length=16)
    x = jax.random.normal(key, (batch, seq, d_model), dtype=jnp.float32)
    out = jax.block_until_ready(mod(x, force_pallas=True))
    ref = x + mod.pe[:, :seq, :]
    assert out.shape == (batch, seq, d_model) and out.dtype == ref.dtype
    assert jnp.allclose(out, ref, atol=1e-6), "mismatch (lane-dense, single tile)"

    # 2) Multi-tile 1-D grid with batch folded into the block
    #    (rows = 128, row_tile = 32 -> 4 parallel grid steps).
    b2, s2, d2 = 2, 256, 64
    mod2 = PositionalEncoding(d2, max_seq_length=512)
    x2 = jax.random.normal(jax.random.PRNGKey(0), (b2, s2, d2), dtype=jnp.float32)
    out2 = jax.block_until_ready(mod2(x2, row_tile=32, force_pallas=True))
    ref2 = x2 + mod2.pe[:, :s2, :]
    assert jnp.allclose(out2, ref2, atol=1e-6), "mismatch (lane-dense, multi-tile)"

    # 3) Partial trailing tile + pe buffer longer than S (prefix-only DMA).
    b3, s3, d3 = 3, 48, 256
    mod3 = PositionalEncoding(d3, max_seq_length=64)
    x3 = jax.random.normal(jax.random.PRNGKey(0), (b3, s3, d3), dtype=jnp.float32)
    out3 = jax.block_until_ready(mod3(x3, row_tile=40, force_pallas=True))
    ref3 = x3 + mod3.pe[:, :s3, :]
    assert jnp.allclose(out3, ref3, atol=1e-6), "mismatch (partial trailing tile)"

    # 4) bf16 activations vs fp32 buffer (promotes to fp32, matches PyTorch).
    x4 = x.astype(jnp.bfloat16)
    out4 = jax.block_until_ready(mod(x4, force_pallas=True))
    ref4 = x4 + mod.pe[:, :seq, :]
    assert out4.dtype == jnp.float32
    assert jnp.allclose(out4, ref4, atol=1e-2), "mismatch (bf16 promotion)"

    # 5) Ragged d_model (S*D not a multiple of 128) -> fused XLA add path.
    b5, s5, d5 = 2, 16, 24
    mod5 = PositionalEncoding(d5, max_seq_length=32)
    x5 = jax.random.normal(jax.random.PRNGKey(0), (b5, s5, d5), dtype=jnp.float32)
    out5 = jax.block_until_ready(mod5(x5))
    ref5 = x5 + mod5.pe[:, :s5, :]
    assert jnp.allclose(out5, ref5, atol=1e-6), "mismatch (ragged XLA fallback)"

    print("KERNEL_OK")
</pallas_src>

<mosaic_0001>
module attributes {stable_mosaic.version = 11 : i64} {
  func.func @_add_pe_kernel(%arg0: i32, %arg1: memref<2x2x128xf32, #tpu.memory_space<vmem>>, %arg2: memref<1x2x128xf32, #tpu.memory_space<vmem>>, %arg3: memref<2x2x128xf32, #tpu.memory_space<vmem>>) attributes {dimension_semantics = [#tpu.dimension_semantics<parallel>], iteration_bounds = array<i64: 1>, scalar_prefetch = 0 : i64, scratch_operands = 0 : i64, tpu.core_type = #tpu.core_type<tc>, window_params = [{transform_indices = @transform_0, window_bounds = array<i64: 2, 2, 128>}, {transform_indices = @transform_1, window_bounds = array<i64: 1, 2, 128>}, {transform_indices = @transform_2, window_bounds = array<i64: 2, 2, 128>}]} {
    %c0 = arith.constant 0 : index
    %c0_0 = arith.constant 0 : index
    %c0_1 = arith.constant 0 : index
    %0 = vector.load %arg1[%c0, %c0_0, %c0_1] : memref<2x2x128xf32, #tpu.memory_space<vmem>>, vector<2x2x128xf32>
    %c0_2 = arith.constant 0 : index
    %c0_3 = arith.constant 0 : index
    %c0_4 = arith.constant 0 : index
    %1 = vector.load %arg2[%c0_2, %c0_3, %c0_4] : memref<1x2x128xf32, #tpu.memory_space<vmem>>, vector<1x2x128xf32>
    %2 = vector.broadcast %1 : vector<1x2x128xf32> to vector<2x2x128xf32>
    %3 = arith.addf %0, %2 : vector<2x2x128xf32>
    %c0_5 = arith.constant 0 : index
    %c0_6 = arith.constant 0 : index
    %c0_7 = arith.constant 0 : index
    %4 = vector.load %arg3[%c0_5, %c0_6, %c0_7] : memref<2x2x128xf32, #tpu.memory_space<vmem>>, vector<2x2x128xf32>
    tpu.vector_store %arg3[%c0_5, %c0_6, %c0_7], %3 {strides = array<i32>} : memref<2x2x128xf32, #tpu.memory_space<vmem>>, vector<2x2x128xf32>,
    return
  }
  func.func @transform_0(%arg0: i32) -> (i32, i32, i32) {
    %c0_i32 = arith.constant 0 : i32
    %c0_i32_0 = arith.constant 0 : i32
    %c0_i32_1 = arith.constant 0 : i32
    return %c0_i32, %arg0, %c0_i32_0 : i32, i32, i32
  }
  func.func @transform_1(%arg0: i32) -> (i32, i32, i32) {
    %c0_i32 = arith.constant 0 : i32
    %c0_i32_0 = arith.constant 0 : i32
    %c0_i32_1 = arith.constant 0 : i32
    return %c0_i32, %arg0, %c0_i32_0 : i32, i32, i32
  }
  func.func @transform_2(%arg0: i32) -> (i32, i32, i32) {
    %c0_i32 = arith.constant 0 : i32
    %c0_i32_0 = arith.constant 0 : i32
    %c0_i32_1 = arith.constant 0 : i32
    return %c0_i32, %arg0, %c0_i32_0 : i32, i32, i32
  }
}

</mosaic_0001>

<llo_original>
// kernel: tpu_custom_call.1
$region0: #{tpu_custom_call.1}
  #allocation0 [shape = 'u32[]', space=smem, size = 0x4, offset = 0x4, fixed_abs, tag = 'smem constant byte address 0x4 - core index']
  #allocation1 [shape = 'u32[144,128]{1,0:T(1,128)}', space=vmem, size = 0x12000, scoped, tag = 'internal scratch']
  %s0 = inlined_call_operand.hbm [shape: f32[2,2,128], index: 0, kind: input, shape index: {}]
  %s1 = inlined_call_operand.vmem [shape: f32[1,2,128], index: 1, kind: input, shape index: {}]
  %s2 = inlined_call_operand.hbm [shape: f32[2,2,128], index: 2, kind: output, shape index: {}]
  %s3 = sld [smem:[#allocation0]]
  $region22: #{tpu_custom_call.1} parent=0
    _
  %s5 = ssub.s32 1, %s3
  %s6 = scalar_select 0, %s5, %s3
  $region1: #{tpu_custom_call.1} parent=0
    #allocation2 [shape = 'u8[2048]{0}', space=vmem, size = 0x800, scoped, tag = 'input window, operand 0, single buffered']
    #allocation3 [shape = 's32[1]{0}', space=sflag, size = 0x4, scoped, tag = 'scoped memory for tpu_custom_call.1']
    #allocation4 [shape = 's32[1]{0}', space=sflag, size = 0x4, scoped, tag = 'scoped memory for tpu_custom_call.1']
    #allocation5 [shape = 'u8[2048]{0}', space=vmem, size = 0x800, scoped, tag = 'output window, operand 0, single buffered']
    %7 = vsyncpa [#allocation3], 0
    %8 = vsyncpa [#allocation4], 0
    // Predicated region
    $region2: #{tpu_custom_call.1} parent=1 // pred_check
      _
    $region3: #{tpu_custom_call.1} parent=1 // pred_check_branch
      %10 = sbr.rel (0) target = $region5
    $region4: #{tpu_custom_call.1} parent=1 // pred_region
      %s12 = ssub.s32 64, 64
      %13 = vsyncadd [#allocation3], %s12
      %s14 = sshll.u32 [#allocation2], 4
      %s15 = int_to_ptr.vmem [resolvable:$true] %s14
      %20 = dma.hbm_to_vmem [thread:$0]  %s0, 64, %s15, [#allocation3], 32, 32, 2
    $region5: #{tpu_custom_call.1} parent=1 // pred_fallthru
      _
    // Predicated region
    $region6: #{tpu_custom_call.1} parent=1 // pred_check
      _
    $region7: #{tpu_custom_call.1} parent=1 // pred_check_branch
      %22 = sbr.rel (0) target = $region9
    $region8: #{tpu_custom_call.1} parent=1 // pred_region
      _
    $region9: #{tpu_custom_call.1} parent=1 // pred_fallthru
      _
    // Predicated region
    $region10: #{tpu_custom_call.1} parent=1 // pred_check
      _
    $region11: #{tpu_custom_call.1} parent=1 // pred_check_branch
      %24 = sbr.rel (0) target = $region13
    $region12: #{tpu_custom_call.1} parent=1 // pred_region
      %25 = dma.done [#allocation3], 64
    $region13: #{tpu_custom_call.1} parent=1 // pred_fallthru
      _
    %v26 = vld [vmem:[#allocation2] sm:$0x3]
    %v27 = vld [vmem:[#allocation2 + $0x2] sm:$0x3]
    %v28 = vld [vmem:[%s1] sm:$0x3]
    %v29 = vadd.f32 %v26, %v28
    %v30 = vadd.f32 %v27, %v28
    %31 = vst [vmem:[#allocation5] sm:$0x3] %v29
    %32 = vst [vmem:[#allocation5 + $0x2] sm:$0x3] %v30
    // Predicated region
    $region14: #{tpu_custom_call.1} parent=1 // pred_check
      _
    $region15: #{tpu_custom_call.1} parent=1 // pred_check_branch
      %34 = sbr.rel (0) target = $region17
    $region16: #{tpu_custom_call.1} parent=1 // pred_region
      %s36 = ssub.s32 64, 64
      %37 = vsyncadd [#allocation4], %s36
      %s38 = sshll.u32 [#allocation5], 4
      %s39 = int_to_ptr.vmem [resolvable:$true] %s38
      %44 = dma.vmem_to_hbm [thread:$0]  %s39, 64, %s2, [#allocation4], 32, 32, 2
    $region17: #{tpu_custom_call.1} parent=1 // pred_fallthru
      _
    // Predicated region
    $region18: #{tpu_custom_call.1} parent=1 // pred_check
      _
    $region19: #{tpu_custom_call.1} parent=1 // pred_check_branch
      %46 = sbr.rel (0) target = $region21
    $region20: #{tpu_custom_call.1} parent=1 // pred_region
      %47 = dma.done [#allocation4], 64
    $region21: #{tpu_custom_call.1} parent=1 // pred_fallthru
      _
    %48 = vsyncpa [#allocation3], 1
    %49 = vsyncpa [#allocation4], 1

</llo_original>
